<compile_context>
chip_gen: v7x
topology: tpu7x:2x2x1
jax: 0.10.0
libtpu: 0.0.40
codegen_flags: <defaults>
</compile_context>

<pallas_src>
import functools

import jax
import jax.numpy as jnp
from jax.experimental import pallas as pl
from jax.experimental.pallas import tpu as pltpu


def _round_up(n, m):
    return ((n + m - 1) // m) * m


def _tpu_vmem_capacity_bytes():
    """Physical VMEM per TensorCore (64 MiB on v7x, 128 MiB on v5e/v6e)."""
    try:
        return int(pltpu.get_tpu_info().vmem_capacity_bytes)
    except Exception:
        pass
    try:
        kind = jax.devices()[0].device_kind.lower()
        if "v7" in kind:
            return 64 * 1024 * 1024
    except Exception:
        pass
    return 128 * 1024 * 1024


def _num_tensorcores():
    """Per-chip TensorCores that a 'parallel' grid axis can shard over."""
    try:
        kind = jax.devices()[0].device_kind.lower()
        if "v7" in kind:
            return 2
    except Exception:
        pass
    return 1


def _make_spec(shape, index_map, buffered=None):
    """BlockSpec, optionally with an explicit pipeline buffer count (fallback-safe)."""
    if buffered is not None:
        try:
            return pl.BlockSpec(shape, index_map, pipeline_mode=pl.Buffered(buffered))
        except Exception:
            pass
    return pl.BlockSpec(shape, index_map)


# --------------------------------------------------------------------------------------
# Kernels
# --------------------------------------------------------------------------------------
def _adv_kernel_fused(x_ref, wt_ref, wg_ref, bt_ref, bg_ref, wout_ref, bout_ref, out_ref):
    """Single output tile per batch tile: gated-tanh features never leave vregs."""
    x = x_ref[...].astype(wt_ref.dtype)  # cheap per-tile cast; no-op if x is already bf16
    t = jnp.tanh(jnp.dot(x, wt_ref[...], preferred_element_type=jnp.float32) + bt_ref[...])
    g = jax.nn.sigmoid(jnp.dot(x, wg_ref[...], preferred_element_type=jnp.float32) + bg_ref[...])
    v = (t * g).astype(wout_ref.dtype)
    out = jnp.dot(v, wout_ref[...], preferred_element_type=jnp.float32) + bout_ref[...]
    out_ref[...] = out.astype(out_ref.dtype)


def _adv_kernel_cols(x_ref, wt_ref, wg_ref, bt_ref, bg_ref, wout_ref, bout_ref, out_ref, v_ref):
    """Output-column-tiled variant: features computed once per batch tile (j == 0),
    kept in VMEM scratch (bf16), reused for every Wout column tile."""
    @pl.when(pl.program_id(1) == 0)
    def _():
        x = x_ref[...].astype(wt_ref.dtype)
        t = jnp.tanh(jnp.dot(x, wt_ref[...], preferred_element_type=jnp.float32) + bt_ref[...])
        g = jax.nn.sigmoid(jnp.dot(x, wg_ref[...], preferred_element_type=jnp.float32) + bg_ref[...])
        v_ref[...] = (t * g).astype(v_ref.dtype)

    out = jnp.dot(v_ref[...], wout_ref[...], preferred_element_type=jnp.float32) + bout_ref[...]
    out_ref[...] = out.astype(out_ref.dtype)


# --------------------------------------------------------------------------------------
# Parameter packing (one-time): concat + pad + cast
# --------------------------------------------------------------------------------------
def pack_params(p, weight_dtype=jnp.bfloat16):
    """Pack effective dense weights (weight_norm already folded) into lane-dense slabs."""
    in_dim, h1 = p["w1t"].shape
    h2 = p["w2t"].shape[1]
    out_dim = p["wl1"].shape[1]
    H = h1 + h2
    in_pad = _round_up(in_dim, 128)
    H_pad = _round_up(H, 128)
    O_pad = _round_up(out_dim, 128)

    def first_layer(wa, wb):
        w = jnp.concatenate([wa, wb], axis=1)  # [in, H]
        return jnp.pad(w, ((0, in_pad - in_dim), (0, H_pad - H))).astype(weight_dtype)

    wt = first_layer(p["w1t"], p["w2t"])
    wg = first_layer(p["w1g"], p["w2g"])
    bt = jnp.pad(jnp.concatenate([p["b1t"], p["b2t"]], axis=1),
                 ((0, 0), (0, H_pad - H))).astype(jnp.float32)
    bg = jnp.pad(jnp.concatenate([p["b1g"], p["b2g"]], axis=1),
                 ((0, 0), (0, H_pad - H))).astype(jnp.float32)

    wout = jnp.concatenate([p["wl1"], p["wl2"]], axis=0)  # [H, out]
    wout = jnp.pad(wout, ((0, H_pad - H), (0, O_pad - out_dim))).astype(weight_dtype)
    bout = jnp.pad(p["bl1"] + p["bl2"], ((0, 0), (0, O_pad - out_dim))).astype(jnp.float32)

    return dict(wt=wt, wg=wg, bt=bt, bg=bg, wout=wout, bout=bout,
                in_dim=in_dim, out_dim=out_dim)


# --------------------------------------------------------------------------------------
# Tile / VMEM-budget selection (per chip generation)
# --------------------------------------------------------------------------------------
def _select_tiles(B8, in_pad, H_pad, O_pad, x_bytes, out_bytes, w_bytes, tb_req, tn_req):
    num_cores = _num_tensorcores()
    phys = _tpu_vmem_capacity_bytes()
    vmem_limit = min(int(phys * 0.75), 100 * 1024 * 1024)  # ~48 MiB v7x, ~96 MiB v5e/v6e

    # Column-tile the output projection only when the resident Wout slab would be large.
    if tn_req is not None:
        tn = min(_round_up(tn_req, 128), O_pad)
    elif H_pad * O_pad * w_bytes > 8 * 1024 * 1024 or O_pad > 2048:
        tn = min(1024, O_pad)
    else:
        tn = O_pad
    col_tiled = tn < O_pad

    # VMEM bytes that do not scale with tb (single-buffered resident weights/biases).
    fixed = 2 * in_pad * H_pad * w_bytes                      # Wt + Wg
    fixed += (2 * H_pad + O_pad) * 4                          # biases (fp32)
    if col_tiled:
        fixed += 2 * H_pad * tn * w_bytes                     # streamed Wout tiles (x2 bufs)
    else:
        fixed += H_pad * O_pad * w_bytes                      # resident Wout

    def per_tb(tb):
        b = 2 * tb * in_pad * x_bytes                         # double-buffered x tiles
        b += 2 * tb * (tn if col_tiled else O_pad) * out_bytes  # double-buffered out tiles
        b += 3 * tb * H_pad * 4                               # fp32 t/g/v intermediates
        if col_tiled:
            b += tb * H_pad * w_bytes                         # bf16 v scratch
        return b

    candidates = [2048, 1024, 512, 256, 128, 64, 32, 16, 8]
    tb = 8
    for c in candidates:
        if tb_req is not None and c > tb_req:
            continue
        if c > max(B8, 8):
            continue
        if fixed + per_tb(c) <= vmem_limit:
            tb = c
            break

    # Keep both TensorCores busy on multi-core parts: grid must have >= 2 batch steps.
    if num_cores >= 2 and B8 >= 16:
        tb = min(tb, _round_up((B8 + num_cores - 1) // num_cores, 8))
    return tb, tn, vmem_limit


# --------------------------------------------------------------------------------------
# pallas_call wrapper
# --------------------------------------------------------------------------------------
@functools.partial(
    jax.jit,
    static_argnames=("tb", "tn", "out_dtype", "vmem_limit", "single_buffer_weights"),
)
def _adv_classifier_padded(x, wt, wg, bt, bg, wout, bout, *,
                           tb, tn, out_dtype, vmem_limit, single_buffer_weights):
    B8, in_pad = x.shape
    H_pad, O_pad = wout.shape
    nb = pl.cdiv(B8, tb)
    res_buf = 1 if single_buffer_weights else None  # None -> default double buffering

    if tn >= O_pad:
        # Fused path: Wout resident, one output tile per batch tile.
        grid = (nb,)
        in_specs = [
            pl.BlockSpec((tb, in_pad), lambda i: (i, 0)),                    # x (pipelined)
            _make_spec((in_pad, H_pad), lambda i: (0, 0), buffered=res_buf),  # Wt
            _make_spec((in_pad, H_pad), lambda i: (0, 0), buffered=res_buf),  # Wg
            _make_spec((1, H_pad), lambda i: (0, 0), buffered=res_buf),       # bt
            _make_spec((1, H_pad), lambda i: (0, 0), buffered=res_buf),       # bg
            _make_spec((H_pad, O_pad), lambda i: (0, 0), buffered=res_buf),   # Wout
            _make_spec((1, O_pad), lambda i: (0, 0), buffered=res_buf),       # bout
        ]
        out_specs = pl.BlockSpec((tb, O_pad), lambda i: (i, 0))
        kernel = _adv_kernel_fused
        scratch = []
        dims = ("parallel",)
    else:
        # Column-tiled path for large answer vocabularies.
        grid = (nb, pl.cdiv(O_pad, tn))
        in_specs = [
            pl.BlockSpec((tb, in_pad), lambda i, j: (i, 0)),                     # x (re-used across j)
            _make_spec((in_pad, H_pad), lambda i, j: (0, 0), buffered=res_buf),   # Wt
            _make_spec((in_pad, H_pad), lambda i, j: (0, 0), buffered=res_buf),   # Wg
            _make_spec((1, H_pad), lambda i, j: (0, 0), buffered=res_buf),        # bt
            _make_spec((1, H_pad), lambda i, j: (0, 0), buffered=res_buf),        # bg
            pl.BlockSpec((H_pad, tn), lambda i, j: (0, j)),                       # Wout (streamed)
            pl.BlockSpec((1, tn), lambda i, j: (0, j)),                           # bout (streamed)
        ]
        out_specs = pl.BlockSpec((tb, tn), lambda i, j: (i, j))
        kernel = _adv_kernel_cols
        scratch = [pltpu.VMEM((tb, H_pad), wout.dtype)]
        dims = ("parallel", "arbitrary")

    return pl.pallas_call(
        kernel,
        out_shape=jax.ShapeDtypeStruct((B8, O_pad), out_dtype),
        grid_spec=pltpu.PrefetchScalarGridSpec(
            num_scalar_prefetch=0,
            grid=grid,
            in_specs=in_specs,
            out_specs=out_specs,
            scratch_shapes=scratch,
        ),
        compiler_params=pltpu.CompilerParams(
            dimension_semantics=dims,
            vmem_limit_bytes=vmem_limit,
        ),
    )(x, wt, wg, bt, bg, wout, bout)


def adv_classifier(x, packed, *, tb=None, tn=None, out_dtype=jnp.float32):
    """x: [B, in_dim]. packed: output of pack_params. Returns [B, out_dim]."""
    B, in_dim = x.shape
    assert in_dim == packed["in_dim"]
    out_dim = packed["out_dim"]
    wt, wg, bt, bg, wout, bout = (packed[k] for k in ("wt", "wg", "bt", "bg", "wout", "bout"))
    in_pad, H_pad = wt.shape
    O_pad = wout.shape[1]

    B8 = max(_round_up(B, 8), 8)  # pad batch only to the sublane multiple (no tile rounding)
    x_bytes = jnp.dtype(x.dtype).itemsize
    out_bytes = jnp.dtype(out_dtype).itemsize
    w_bytes = jnp.dtype(wt.dtype).itemsize
    tb_sel, tn_sel, vmem_limit = _select_tiles(
        B8, in_pad, H_pad, O_pad, x_bytes, out_bytes, w_bytes, tb, tn)

    if (B8 != B) or (in_pad != in_dim):
        # No-op when batch is 8-aligned and in_dim is 128-aligned (typical production dims).
        x = jnp.pad(x, ((0, B8 - B), (0, in_pad - in_dim)))

    try:
        out = _adv_classifier_padded(
            x, wt, wg, bt, bg, wout, bout,
            tb=tb_sel, tn=tn_sel, out_dtype=out_dtype, vmem_limit=vmem_limit,
            single_buffer_weights=True)
    except Exception:
        out = _adv_classifier_padded(
            x, wt, wg, bt, bg, wout, bout,
            tb=tb_sel, tn=tn_sel, out_dtype=out_dtype, vmem_limit=vmem_limit,
            single_buffer_weights=False)
    return out[:B, :out_dim]


# --------------------------------------------------------------------------------------
# Init + references
# --------------------------------------------------------------------------------------
def init_params(key, in_dim, hid_dim_1, hid_dim_2, out_dim):
    """PyTorch Linear weight is [out, in]; we store the transpose [in, out].
    NOTE: weight_norm(dim=None) must already be folded (g * v / ||v||) into these weights."""
    ks = jax.random.split(key, 6)

    def dense(k, fan_in, fan_out):
        bound = 1.0 / jnp.sqrt(fan_in)
        kw, kb = jax.random.split(k)
        w = jax.random.uniform(kw, (fan_in, fan_out), jnp.float32, -bound, bound)
        b = jax.random.uniform(kb, (1, fan_out), jnp.float32, -bound, bound)
        return w, b

    w1t, b1t = dense(ks[0], in_dim, hid_dim_1)
    w1g, b1g = dense(ks[1], in_dim, hid_dim_1)
    w2t, b2t = dense(ks[2], in_dim, hid_dim_2)
    w2g, b2g = dense(ks[3], in_dim, hid_dim_2)
    wl1, bl1 = dense(ks[4], hid_dim_1, out_dim)
    wl2, bl2 = dense(ks[5], hid_dim_2, out_dim)
    return dict(w1t=w1t, b1t=b1t, w1g=w1g, b1g=b1g,
                w2t=w2t, b2t=b2t, w2g=w2g, b2g=b2g,
                wl1=wl1, bl1=bl1, wl2=wl2, bl2=bl2)


def adv_classifier_ref(x, p):
    """Pure-JAX fp32 reference."""
    v1 = jnp.tanh(x @ p["w1t"] + p["b1t"]) * jax.nn.sigmoid(x @ p["w1g"] + p["b1g"])
    v2 = jnp.tanh(x @ p["w2t"] + p["b2t"]) * jax.nn.sigmoid(x @ p["w2g"] + p["b2g"])
    return (v1 @ p["wl1"] + p["bl1"]) + (v2 @ p["wl2"] + p["bl2"])


def adv_classifier_ref_quantized(x, p, weight_dtype=jnp.bfloat16):
    """Reference matching the kernel's bf16-input / fp32-accumulate numerics."""
    q = lambda a: a.astype(weight_dtype).astype(jnp.float32)
    xq = q(x)
    v1 = jnp.tanh(xq @ q(p["w1t"]) + p["b1t"]) * jax.nn.sigmoid(xq @ q(p["w1g"]) + p["b1g"])
    v2 = jnp.tanh(xq @ q(p["w2t"]) + p["b2t"]) * jax.nn.sigmoid(xq @ q(p["w2g"]) + p["b2g"])
    return (q(v1) @ q(p["wl1"]) + p["bl1"]) + (q(v2) @ q(p["wl2"]) + p["bl2"])


# --------------------------------------------------------------------------------------
# Demo / correctness check
# --------------------------------------------------------------------------------------
if __name__ == "__main__":
    key = jax.random.PRNGKey(0)
    kx, kp, kx2, kp2 = jax.random.split(key, 4)

    # Case 1: small shapes, fused path (single resident Wout, grid over batch only).
    B, in_dim, hid_dim_1, hid_dim_2, out_dim = 8, 32, 64, 48, 16
    x = jax.random.normal(kx, (B, in_dim), dtype=jnp.float32)
    params = init_params(kp, in_dim, hid_dim_1, hid_dim_2, out_dim)
    packed = pack_params(params, weight_dtype=jnp.bfloat16)

    logits = jax.block_until_ready(adv_classifier(x, packed))
    assert logits.shape == (B, out_dim)
    ref_q = adv_classifier_ref_quantized(x, params)
    assert jnp.allclose(logits, ref_q, atol=2e-3, rtol=2e-3), "mismatch vs quantized ref (fused)"
    ref = adv_classifier_ref(x, params)
    assert jnp.allclose(logits, ref, atol=5e-2, rtol=5e-2), "mismatch vs fp32 ref (fused)"

    # Case 2: ragged batch + forced output-column tiling (large-vocab code path).
    B2, out_dim2 = 20, 200
    x2 = jax.random.normal(kx2, (B2, in_dim), dtype=jnp.float32)
    params2 = init_params(kp2, in_dim, hid_dim_1, hid_dim_2, out_dim2)
    packed2 = pack_params(params2, weight_dtype=jnp.bfloat16)

    logits2 = jax.block_until_ready(adv_classifier(x2, packed2, tb=16, tn=128))
    assert logits2.shape == (B2, out_dim2)
    ref2_q = adv_classifier_ref_quantized(x2, params2)
    assert jnp.allclose(logits2, ref2_q, atol=2e-3, rtol=2e-3), "mismatch vs quantized ref (cols)"

    print("KERNEL_OK")
</pallas_src>

<mosaic_0001>
module attributes {stable_mosaic.version = 11 : i64} {
  func.func @_adv_kernel_fused(%arg0: i32, %arg1: memref<8x128xf32, #tpu.memory_space<vmem>>, %arg2: memref<128x128xbf16, #tpu.memory_space<vmem>>, %arg3: memref<128x128xbf16, #tpu.memory_space<vmem>>, %arg4: memref<1x128xf32, #tpu.memory_space<vmem>>, %arg5: memref<1x128xf32, #tpu.memory_space<vmem>>, %arg6: memref<128x128xbf16, #tpu.memory_space<vmem>>, %arg7: memref<1x128xf32, #tpu.memory_space<vmem>>, %arg8: memref<8x128xf32, #tpu.memory_space<vmem>>) attributes {dimension_semantics = [#tpu.dimension_semantics<parallel>], iteration_bounds = array<i64: 1>, scalar_prefetch = 0 : i64, scratch_operands = 0 : i64, tpu.core_type = #tpu.core_type<tc>, window_params = [{transform_indices = @transform_0, window_bounds = array<i64: 8, 128>}, {pipeline_mode = #tpu.pipeline_mode<synchronous>, transform_indices = @transform_1, window_bounds = array<i64: 128, 128>}, {pipeline_mode = #tpu.pipeline_mode<synchronous>, transform_indices = @transform_2, window_bounds = array<i64: 128, 128>}, {pipeline_mode = #tpu.pipeline_mode<synchronous>, transform_indices = @transform_3, window_bounds = array<i64: 1, 128>}, {pipeline_mode = #tpu.pipeline_mode<synchronous>, transform_indices = @transform_4, window_bounds = array<i64: 1, 128>}, {pipeline_mode = #tpu.pipeline_mode<synchronous>, transform_indices = @transform_5, window_bounds = array<i64: 128, 128>}, {pipeline_mode = #tpu.pipeline_mode<synchronous>, transform_indices = @transform_6, window_bounds = array<i64: 1, 128>}, {transform_indices = @transform_7, window_bounds = array<i64: 8, 128>}]} {
    %c0 = arith.constant 0 : index
    %c0_0 = arith.constant 0 : index
    %0 = vector.load %arg1[%c0, %c0_0] : memref<8x128xf32, #tpu.memory_space<vmem>>, vector<8x128xf32>
    %1 = arith.truncf %0 : vector<8x128xf32> to vector<8x128xbf16>
    %c0_1 = arith.constant 0 : index
    %c0_2 = arith.constant 0 : index
    %2 = vector.load %arg2[%c0_1, %c0_2] : memref<128x128xbf16, #tpu.memory_space<vmem>>, vector<128x128xbf16>
    %cst = arith.constant dense<0.000000e+00> : vector<8x128xf32>
    %3 = tpu.matmul %1, %2, %cst {dimension_numbers = #tpu.dot_dimension_numbers<[1], [0], [0], [1], [0, 0, 1, 1], [], []>} : vector<8x128xbf16>, vector<128x128xbf16>, vector<8x128xf32> -> vector<8x128xf32>
    %c0_3 = arith.constant 0 : index
    %c0_4 = arith.constant 0 : index
    %4 = vector.load %arg4[%c0_3, %c0_4] : memref<1x128xf32, #tpu.memory_space<vmem>>, vector<1x128xf32>
    %5 = vector.broadcast %4 : vector<1x128xf32> to vector<8x128xf32>
    %6 = arith.addf %3, %5 : vector<8x128xf32>
    %7 = math.tanh %6 : vector<8x128xf32>
    %c0_5 = arith.constant 0 : index
    %c0_6 = arith.constant 0 : index
    %8 = vector.load %arg3[%c0_5, %c0_6] : memref<128x128xbf16, #tpu.memory_space<vmem>>, vector<128x128xbf16>
    %cst_7 = arith.constant dense<0.000000e+00> : vector<8x128xf32>
    %9 = tpu.matmul %1, %8, %cst_7 {dimension_numbers = #tpu.dot_dimension_numbers<[1], [0], [0], [1], [0, 0, 1, 1], [], []>} : vector<8x128xbf16>, vector<128x128xbf16>, vector<8x128xf32> -> vector<8x128xf32>
    %c0_8 = arith.constant 0 : index
    %c0_9 = arith.constant 0 : index
    %10 = vector.load %arg5[%c0_8, %c0_9] : memref<1x128xf32, #tpu.memory_space<vmem>>, vector<1x128xf32>
    %11 = vector.broadcast %10 : vector<1x128xf32> to vector<8x128xf32>
    %12 = arith.addf %9, %11 : vector<8x128xf32>
    %13 = arith.negf %12 : vector<8x128xf32>
    %14 = math.exp %13 : vector<8x128xf32>
    %cst_10 = arith.constant 1.000000e+00 : f32
    %15 = vector.broadcast %cst_10 : f32 to vector<8x128xf32>
    %16 = arith.addf %15, %14 : vector<8x128xf32>
    %17 = arith.divf %15, %16 : vector<8x128xf32>
    %18 = arith.mulf %7, %17 : vector<8x128xf32>
    %19 = arith.truncf %18 : vector<8x128xf32> to vector<8x128xbf16>
    %c0_11 = arith.constant 0 : index
    %c0_12 = arith.constant 0 : index
    %20 = vector.load %arg6[%c0_11, %c0_12] : memref<128x128xbf16, #tpu.memory_space<vmem>>, vector<128x128xbf16>
    %cst_13 = arith.constant dense<0.000000e+00> : vector<8x128xf32>
    %21 = tpu.matmul %19, %20, %cst_13 {dimension_numbers = #tpu.dot_dimension_numbers<[1], [0], [0], [1], [0, 0, 1, 1], [], []>} : vector<8x128xbf16>, vector<128x128xbf16>, vector<8x128xf32> -> vector<8x128xf32>
    %c0_14 = arith.constant 0 : index
    %c0_15 = arith.constant 0 : index
    %22 = vector.load %arg7[%c0_14, %c0_15] : memref<1x128xf32, #tpu.memory_space<vmem>>, vector<1x128xf32>
    %23 = vector.broadcast %22 : vector<1x128xf32> to vector<8x128xf32>
    %24 = arith.addf %21, %23 : vector<8x128xf32>
    %c0_16 = arith.constant 0 : index
    %c0_17 = arith.constant 0 : index
    %25 = vector.load %arg8[%c0_16, %c0_17] : memref<8x128xf32, #tpu.memory_space<vmem>>, vector<8x128xf32>
    tpu.vector_store %arg8[%c0_16, %c0_17], %24 {strides = array<i32>} : memref<8x128xf32, #tpu.memory_space<vmem>>, vector<8x128xf32>,
    return
  }
  func.func @transform_0(%arg0: i32) -> (i32, i32) {
    %c0_i32 = arith.constant 0 : i32
    %c0_i32_0 = arith.constant 0 : i32
    return %arg0, %c0_i32 : i32, i32
  }
  func.func @transform_1(%arg0: i32) -> (i32, i32) {
    %c0_i32 = arith.constant 0 : i32
    %c0_i32_0 = arith.constant 0 : i32
    %c0_i32_1 = arith.constant 0 : i32
    return %c0_i32, %c0_i32_0 : i32, i32
  }
  func.func @transform_2(%arg0: i32) -> (i32, i32) {
    %c0_i32 = arith.constant 0 : i32
    %c0_i32_0 = arith.constant 0 : i32
    %c0_i32_1 = arith.constant 0 : i32
    return %c0_i32, %c0_i32_0 : i32, i32
  }
  func.func @transform_3(%arg0: i32) -> (i32, i32) {
    %c0_i32 = arith.constant 0 : i32
    %c0_i32_0 = arith.constant 0 : i32
    %c0_i32_1 = arith.constant 0 : i32
    return %c0_i32, %c0_i32_0 : i32, i32
  }
  func.func @transform_4(%arg0: i32) -> (i32, i32) {
    %c0_i32 = arith.constant 0 : i32
    %c0_i32_0 = arith.constant 0 : i32
    %c0_i32_1 = arith.constant 0 : i32
    return %c0_i32, %c0_i32_0 : i32, i32
  }
  func.func @transform_5(%arg0: i32) -> (i32, i32) {
    %c0_i32 = arith.constant 0 : i32
    %c0_i32_0 = arith.constant 0 : i32
    %c0_i32_1 = arith.constant 0 : i32
    return %c0_i32, %c0_i32_0 : i32, i32
  }
  func.func @transform_6(%arg0: i32) -> (i32, i32) {
    %c0_i32 = arith.constant 0 : i32
    %c0_i32_0 = arith.constant 0 : i32
    %c0_i32_1 = arith.constant 0 : i32
    return %c0_i32, %c0_i32_0 : i32, i32
  }
  func.func @transform_7(%arg0: i32) -> (i32, i32) {
    %c0_i32 = arith.constant 0 : i32
    %c0_i32_0 = arith.constant 0 : i32
    return %arg0, %c0_i32 : i32, i32
  }
}

module attributes {stable_mosaic.version = 11 : i64} {
  func.func @_adv_kernel_fused(%arg0: i32, %arg1: memref<8x128xf32, #tpu.memory_space<vmem>>, %arg2: memref<128x128xbf16, #tpu.memory_space<vmem>>, %arg3: memref<128x128xbf16, #tpu.memory_space<vmem>>, %arg4: memref<1x128xf32, #tpu.memory_space<vmem>>, %arg5: memref<1x128xf32, #tpu.memory_space<vmem>>, %arg6: memref<128x128xbf16, #tpu.memory_space<vmem>>, %arg7: memref<1x128xf32, #tpu.memory_space<vmem>>, %arg8: memref<8x128xf32, #tpu.memory_space<vmem>>) attributes {dimension_semantics = [#tpu.dimension_semantics<parallel>], iteration_bounds = array<i64: 1>, scalar_prefetch = 0 : i64, scratch_operands = 0 : i64, tpu.core_type = #tpu.core_type<tc>, window_params = [{transform_indices = @transform_0, window_bounds = array<i64: 8, 128>}, {pipeline_mode = #tpu.pipeline_mode<synchronous>, transform_indices = @transform_1, window_bounds = array<i64: 128, 128>}, {pipeline_mode = #tpu.pipeline_mode<synchronous>, transform_indices = @transform_2, window_bounds = array<i64: 128, 128>}, {pipeline_mode = #tpu.pipeline_mode<synchronous>, transform_indices = @transform_3, window_bounds = array<i64: 1, 128>}, {pipeline_mode = #tpu.pipeline_mode<synchronous>, transform_indices = @transform_4, window_bounds = array<i64: 1, 128>}, {pipeline_mode = #tpu.pipeline_mode<synchronous>, transform_indices = @transform_5, window_bounds = array<i64: 128, 128>}, {pipeline_mode = #tpu.pipeline_mode<synchronous>, transform_indices = @transform_6, window_bounds = array<i64: 1, 128>}, {transform_indices = @transform_7, window_bounds = array<i64: 8, 128>}]} {
    %c0 = arith.constant 0 : index
    %c0_0 = arith.constant 0 : index
    %0 = vector.load %arg1[%c0, %c0_0] : memref<8x128xf32, #tpu.memory_space<vmem>>, vector<8x128xf32>
    %1 = arith.truncf %0 : vector<8x128xf32> to vector<8x128xbf16>
    %c0_1 = arith.constant 0 : index
    %c0_2 = arith.constant 0 : index
    %2 = vector.load %arg2[%c0_1, %c0_2] : memref<128x128xbf16, #tpu.memory_space<vmem>>, vector<128x128xbf16>
    %cst = arith.constant dense<0.000000e+00> : vector<8x128xf32>
    %3 = tpu.matmul %1, %2, %cst {dimension_numbers = #tpu.dot_dimension_numbers<[1], [0], [0], [1], [0, 0, 1, 1], [], []>} : vector<8x128xbf16>, vector<128x128xbf16>, vector<8x128xf32> -> vector<8x128xf32>
    %c0_3 = arith.constant 0 : index
    %c0_4 = arith.constant 0 : index
    %4 = vector.load %arg4[%c0_3, %c0_4] : memref<1x128xf32, #tpu.memory_space<vmem>>, vector<1x128xf32>
    %5 = vector.broadcast %4 : vector<1x128xf32> to vector<8x128xf32>
    %6 = arith.addf %3, %5 : vector<8x128xf32>
    %7 = math.tanh %6 : vector<8x128xf32>
    %c0_5 = arith.constant 0 : index
    %c0_6 = arith.constant 0 : index
    %8 = vector.load %arg3[%c0_5, %c0_6] : memref<128x128xbf16, #tpu.memory_space<vmem>>, vector<128x128xbf16>
    %cst_7 = arith.constant dense<0.000000e+00> : vector<8x128xf32>
    %9 = tpu.matmul %1, %8, %cst_7 {dimension_numbers = #tpu.dot_dimension_numbers<[1], [0], [0], [1], [0, 0, 1, 1], [], []>} : vector<8x128xbf16>, vector<128x128xbf16>, vector<8x128xf32> -> vector<8x128xf32>
    %c0_8 = arith.constant 0 : index
    %c0_9 = arith.constant 0 : index
    %10 = vector.load %arg5[%c0_8, %c0_9] : memref<1x128xf32, #tpu.memory_space<vmem>>, vector<1x128xf32>
    %11 = vector.broadcast %10 : vector<1x128xf32> to vector<8x128xf32>
    %12 = arith.addf %9, %11 : vector<8x128xf32>
    %13 = arith.negf %12 : vector<8x128xf32>
    %14 = math.exp %13 : vector<8x128xf32>
    %cst_10 = arith.constant 1.000000e+00 : f32
    %15 = vector.broadcast %cst_10 : f32 to vector<8x128xf32>
    %16 = arith.addf %15, %14 : vector<8x128xf32>
    %17 = arith.divf %15, %16 : vector<8x128xf32>
    %18 = arith.mulf %7, %17 : vector<8x128xf32>
    %19 = arith.truncf %18 : vector<8x128xf32> to vector<8x128xbf16>
    %c0_11 = arith.constant 0 : index
    %c0_12 = arith.constant 0 : index
    %20 = vector.load %arg6[%c0_11, %c0_12] : memref<128x128xbf16, #tpu.memory_space<vmem>>, vector<128x128xbf16>
    %cst_13 = arith.constant dense<0.000000e+00> : vector<8x128xf32>
    %21 = tpu.matmul %19, %20, %cst_13 {dimension_numbers = #tpu.dot_dimension_numbers<[1], [0], [0], [1], [0, 0, 1, 1], [], []>} : vector<8x128xbf16>, vector<128x128xbf16>, vector<8x128xf32> -> vector<8x128xf32>
    %c0_14 = arith.constant 0 : index
    %c0_15 = arith.constant 0 : index
    %22 = vector.load %arg7[%c0_14, %c0_15] : memref<1x128xf32, #tpu.memory_space<vmem>>, vector<1x128xf32>
    %23 = vector.broadcast %22 : vector<1x128xf32> to vector<8x128xf32>
    %24 = arith.addf %21, %23 : vector<8x128xf32>
    %c0_16 = arith.constant 0 : index
    %c0_17 = arith.constant 0 : index
    %25 = vector.load %arg8[%c0_16, %c0_17] : memref<8x128xf32, #tpu.memory_space<vmem>>, vector<8x128xf32>
    tpu.vector_store %arg8[%c0_16, %c0_17], %24 {strides = array<i32>} : memref<8x128xf32, #tpu.memory_space<vmem>>, vector<8x128xf32>,
    return
  }
  func.func @transform_0(%arg0: i32) -> (i32, i32) {
    %c0_i32 = arith.constant 0 : i32
    %c0_i32_0 = arith.constant 0 : i32
    return %arg0, %c0_i32 : i32, i32
  }
  func.func @transform_1(%arg0: i32) -> (i32, i32) {
    %c0_i32 = arith.constant 0 : i32
    %c0_i32_0 = arith.constant 0 : i32
    %c0_i32_1 = arith.constant 0 : i32
    return %c0_i32, %c0_i32_0 : i32, i32
  }
  func.func @transform_2(%arg0: i32) -> (i32, i32) {
    %c0_i32 = arith.constant 0 : i32
    %c0_i32_0 = arith.constant 0 : i32
    %c0_i32_1 = arith.constant 0 : i32
    return %c0_i32, %c0_i32_0 : i32, i32
  }
  func.func @transform_3(%arg0: i32) -> (i32, i32) {
    %c0_i32 = arith.constant 0 : i32
    %c0_i32_0 = arith.constant 0 : i32
    %c0_i32_1 = arith.constant 0 : i32
    return %c0_i32, %c0_i32_0 : i32, i32
  }
  func.func @transform_4(%arg0: i32) -> (i32, i32) {
    %c0_i32 = arith.constant 0 : i32
    %c0_i32_0 = arith.constant 0 : i32
    %c0_i32_1 = arith.constant 0 : i32
    return %c0_i32, %c0_i32_0 : i32, i32
  }
  func.func @transform_5(%arg0: i32) -> (i32, i32) {
    %c0_i32 = arith.constant 0 : i32
    %c0_i32_0 = arith.constant 0 : i32
    %c0_i32_1 = arith.constant 0 : i32
    return %c0_i32, %c0_i32_0 : i32, i32
  }
  func.func @transform_6(%arg0: i32) -> (i32, i32) {
    %c0_i32 = arith.constant 0 : i32
    %c0_i32_0 = arith.constant 0 : i32
    %c0_i32_1 = arith.constant 0 : i32
    return %c0_i32, %c0_i32_0 : i32, i32
  }
  func.func @transform_7(%arg0: i32) -> (i32, i32) {
    %c0_i32 = arith.constant 0 : i32
    %c0_i32_0 = arith.constant 0 : i32
    return %arg0, %c0_i32 : i32, i32
  }
}

</mosaic_0001>

<llo_original>
// kernel: _adv_classifier_padded.1
$region0: #{_adv_classifier_padded.1}
  #allocation0 [shape = 'u32[]', space=smem, size = 0x4, offset = 0x4, fixed_abs, tag = 'smem constant byte address 0x4 - core index']
  #allocation1 [shape = 'u32[144,128]{1,0:T(1,128)}', space=vmem, size = 0x12000, scoped, tag = 'internal scratch']
  %s0 = inlined_call_operand.hbm [shape: f32[8,128], index: 0, kind: input, shape index: {}]
  %s1 = inlined_call_operand.hbm [shape: bf16[128,128], index: 1, kind: input, shape index: {}]
  %s2 = inlined_call_operand.hbm [shape: bf16[128,128], index: 2, kind: input, shape index: {}]
  %s3 = inlined_call_operand.hbm [shape: f32[1,128], index: 3, kind: input, shape index: {}]
  %s4 = inlined_call_operand.hbm [shape: f32[1,128], index: 4, kind: input, shape index: {}]
  %s5 = inlined_call_operand.hbm [shape: bf16[128,128], index: 5, kind: input, shape index: {}]
  %s6 = inlined_call_operand.hbm [shape: f32[1,128], index: 6, kind: input, shape index: {}]
  %s7 = inlined_call_operand.hbm [shape: f32[8,128], index: 7, kind: output, shape index: {}]
  %s8 = sld [smem:[#allocation0]]
  $region66: #{_adv_classifier_padded.1} parent=0
    _
  %s10 = ssub.s32 1, %s8
  %s11 = scalar_select 0, %s10, %s8
  $region1: #{_adv_classifier_padded.1} parent=0
    #allocation2 [shape = 'u8[4096]{0}', space=vmem, size = 0x1000, scoped, tag = 'input window, operand 0, single buffered']
    #allocation3 [shape = 's32[1]{0}', space=sflag, size = 0x4, scoped, tag = 'scoped memory for _adv_classifier_padded.1']
    #allocation4 [shape = 's32[1]{0}', space=sflag, size = 0x4, scoped, tag = 'scoped memory for _adv_classifier_padded.1']
    #allocation5 [shape = 'u8[32768]{0}', space=vmem, size = 0x8000, scoped, tag = 'input window, operand 1, single buffered']
    #allocation6 [shape = 's32[1]{0}', space=sflag, size = 0x4, scoped, tag = 'scoped memory for _adv_classifier_padded.1']
    #allocation7 [shape = 'u8[32768]{0}', space=vmem, size = 0x8000, scoped, tag = 'input window, operand 2, single buffered']
    #allocation8 [shape = 'u8[512]{0}', space=vmem, size = 0x400, scoped, tag = 'input window, operand 3, single buffered']
    #allocation9 [shape = 's32[1]{0}', space=sflag, size = 0x4, scoped, tag = 'scoped memory for _adv_classifier_padded.1']
    #allocation10 [shape = 'u8[512]{0}', space=vmem, size = 0x400, scoped, tag = 'input window, operand 4, single buffered']
    #allocation11 [shape = 'u8[32768]{0}', space=vmem, size = 0x8000, scoped, tag = 'input window, operand 5, single buffered']
    #allocation12 [shape = 's32[1]{0}', space=sflag, size = 0x4, scoped, tag = 'scoped memory for _adv_classifier_padded.1']
    #allocation13 [shape = 'u8[512]{0}', space=vmem, size = 0x400, scoped, tag = 'input window, operand 6, single buffered']
    #allocation14 [shape = 'u8[4096]{0}', space=vmem, size = 0x1000, scoped, tag = 'output window, operand 0, single buffered']
    %12 = vsyncpa [#allocation3], 0
    %13 = vsyncpa [#allocation6], 0
    %14 = vsyncpa [#allocation9], 0
    %15 = vsyncpa [#allocation12], 0
    %16 = vsyncpa [#allocation4], 0
    // Predicated region
    $region2: #{_adv_classifier_padded.1} parent=1 // pred_check
      _
    $region3: #{_adv_classifier_padded.1} parent=1 // pred_check_branch
      %18 = sbr.rel (0) target = $region5
    $region4: #{_adv_classifier_padded.1} parent=1 // pred_region
      %s20 = ssub.s32 128, 128
      %21 = vsyncadd [#allocation3], %s20
      %s23 = sshll.u32 [#allocation2], 4
      %s24 = int_to_ptr.vmem [resolvable:$true] %s23
      %26 = dma.hbm_to_vmem [thread:$0]  %s0, 128, %s24, [#allocation3]
    $region5: #{_adv_classifier_padded.1} parent=1 // pred_fallthru
      _
    // Predicated region
    $region6: #{_adv_classifier_padded.1} parent=1 // pred_check
      _
    $region7: #{_adv_classifier_padded.1} parent=1 // pred_check_branch
      %28 = sbr.rel (0) target = $region9
    $region8: #{_adv_classifier_padded.1} parent=1 // pred_region
      %s30 = ssub.s32 1024, 1024
      %31 = vsyncadd [#allocation6], %s30
      %s32 = sshll.u32 [#allocation5], 4
      %s33 = int_to_ptr.vmem [resolvable:$true] %s32
      %38 = dma.hbm_to_vmem [thread:$0]  %s1, 1024, %s33, [#allocation6], 64, 64, 4
    $region9: #{_adv_classifier_padded.1} parent=1 // pred_fallthru
      _
    // Predicated region
    $region10: #{_adv_classifier_padded.1} parent=1 // pred_check
      _
    $region11: #{_adv_classifier_padded.1} parent=1 // pred_check_branch
      %40 = sbr.rel (0) target = $region13
    $region12: #{_adv_classifier_padded.1} parent=1 // pred_region
      %s42 = ssub.s32 1024, 1024
      %43 = vsyncadd [#allocation6], %s42
      %s44 = sshll.u32 [#allocation7], 4
      %s45 = int_to_ptr.vmem [resolvable:$true] %s44
      %50 = dma.hbm_to_vmem [thread:$0]  %s2, 1024, %s45, [#allocation6], 64, 64, 4
    $region13: #{_adv_classifier_padded.1} parent=1 // pred_fallthru
      _
    // Predicated region
    $region14: #{_adv_classifier_padded.1} parent=1 // pred_check
      _
    $region15: #{_adv_classifier_padded.1} parent=1 // pred_check_branch
      %52 = sbr.rel (0) target = $region17
    $region16: #{_adv_classifier_padded.1} parent=1 // pred_region
      %s54 = ssub.s32 16, 16
      %55 = vsyncadd [#allocation9], %s54
      %s57 = sshll.u32 [#allocation8], 4
      %s58 = int_to_ptr.vmem [resolvable:$true] %s57
      %60 = dma.hbm_to_vmem [thread:$0]  %s3, 16, %s58, [#allocation9]
    $region17: #{_adv_classifier_padded.1} parent=1 // pred_fallthru
      _
    // Predicated region
    $region18: #{_adv_classifier_padded.1} parent=1 // pred_check
      _
    $region19: #{_adv_classifier_padded.1} parent=1 // pred_check_branch
      %62 = sbr.rel (0) target = $region21
    $region20: #{_adv_classifier_padded.1} parent=1 // pred_region
      %s64 = ssub.s32 16, 16
      %65 = vsyncadd [#allocation9], %s64
      %s67 = sshll.u32 [#allocation10], 4
      %s68 = int_to_ptr.vmem [resolvable:$true] %s67
      %70 = dma.hbm_to_vmem [thread:$0]  %s4, 16, %s68, [#allocation9]
    $region21: #{_adv_classifier_padded.1} parent=1 // pred_fallthru
      _
    // Predicated region
    $region22: #{_adv_classifier_padded.1} parent=1 // pred_check
      _
    $region23: #{_adv_classifier_padded.1} parent=1 // pred_check_branch
      %72 = sbr.rel (0) target = $region25
    $region24: #{_adv_classifier_padded.1} parent=1 // pred_region
      %s74 = ssub.s32 1024, 1024
      %75 = vsyncadd [#allocation12], %s74
      %s76 = sshll.u32 [#allocation11], 4
      %s77 = int_to_ptr.vmem [resolvable:$true] %s76
      %82 = dma.hbm_to_vmem [thread:$0]  %s5, 1024, %s77, [#allocation12], 64, 64, 4
    $region25: #{_adv_classifier_padded.1} parent=1 // pred_fallthru
      _
    // Predicated region
    $region26: #{_adv_classifier_padded.1} parent=1 // pred_check
      _
    $region27: #{_adv_classifier_padded.1} parent=1 // pred_check_branch
      %84 = sbr.rel (0) target = $region29
    $region28: #{_adv_classifier_padded.1} parent=1 // pred_region
      %s86 = ssub.s32 16, 16
      %87 = vsyncadd [#allocation12], %s86
      %s89 = sshll.u32 [#allocation13], 4
      %s90 = int_to_ptr.vmem [resolvable:$true] %s89
      %92 = dma.hbm_to_vmem [thread:$0]  %s6, 16, %s90, [#allocation12]
    $region29: #{_adv_classifier_padded.1} parent=1 // pred_fallthru
      _
    // Predicated region
    $region30: #{_adv_classifier_padded.1} parent=1 // pred_check
      _
    $region31: #{_adv_classifier_padded.1} parent=1 // pred_check_branch
      %94 = sbr.rel (0) target = $region33
    $region32: #{_adv_classifier_padded.1} parent=1 // pred_region
      %95 = dma.done [#allocation3], 128
    $region33: #{_adv_classifier_padded.1} parent=1 // pred_fallthru
      _
    // Predicated region
    $region34: #{_adv_classifier_padded.1} parent=1 // pred_check
      _
    $region35: #{_adv_classifier_padded.1} parent=1 // pred_check_branch
      %97 = sbr.rel (0) target = $region37
    $region36: #{_adv_classifier_padded.1} parent=1 // pred_region
      %98 = dma.done [#allocation6], 1024
    $region37: #{_adv_classifier_padded.1} parent=1 // pred_fallthru
      _
    // Predicated region
    $region38: #{_adv_classifier_padded.1} parent=1 // pred_check
      _
    $region39: #{_adv_classifier_padded.1} parent=1 // pred_check_branch
      %100 = sbr.rel (0) target = $region41
    $region40: #{_adv_classifier_padded.1} parent=1 // pred_region
      %101 = dma.done [#allocation6], 1024
    $region41: #{_adv_classifier_padded.1} parent=1 // pred_fallthru
      _
    // Predicated region
    $region42: #{_adv_classifier_padded.1} parent=1 // pred_check
      _
    $region43: #{_adv_classifier_padded.1} parent=1 // pred_check_branch
      %103 = sbr.rel (0) target = $region45
    $region44: #{_adv_classifier_padded.1} parent=1 // pred_region
      %104 = dma.done [#allocation9], 16
    $region45: #{_adv_classifier_padded.1} parent=1 // pred_fallthru
      _
    // Predicated region
    $region46: #{_adv_classifier_padded.1} parent=1 // pred_check
      _
    $region47: #{_adv_classifier_padded.1} parent=1 // pred_check_branch
      %106 = sbr.rel (0) target = $region49
    $region48: #{_adv_classifier_padded.1} parent=1 // pred_region
      %107 = dma.done [#allocation9], 16
    $region49: #{_adv_classifier_padded.1} parent=1 // pred_fallthru
      _
    // Predicated region
    $region50: #{_adv_classifier_padded.1} parent=1 // pred_check
      _
    $region51: #{_adv_classifier_padded.1} parent=1 // pred_check_branch
      %109 = sbr.rel (0) target = $region53
    $region52: #{_adv_classifier_padded.1} parent=1 // pred_region
      %110 = dma.done [#allocation12], 1024
    $region53: #{_adv_classifier_padded.1} parent=1 // pred_fallthru
      _
    // Predicated region
    $region54: #{_adv_classifier_padded.1} parent=1 // pred_check
      _
    $region55: #{_adv_classifier_padded.1} parent=1 // pred_check_branch
      %112 = sbr.rel (0) target = $region57
    $region56: #{_adv_classifier_padded.1} parent=1 // pred_region
      %113 = dma.done [#allocation12], 16
    $region57: #{_adv_classifier_padded.1} parent=1 // pred_fallthru
      _
    %v115 = vld [vmem:[#allocation2] sm:$0xff]
    %v116 = vpack.c.bf16 %v115, %v115
    %v117 = vld [vmem:[#allocation5] sm:$0xf]
    %v118 = vld [vmem:[#allocation5 + $0x4] sm:$0xf]
    %v119 = vld [vmem:[#allocation5 + $0x8] sm:$0xf]
    %v120 = vld [vmem:[#allocation5 + $0xc] sm:$0xf]
    %v121 = vld [vmem:[#allocation5 + $0x10] sm:$0xf]
    %v122 = vld [vmem:[#allocation5 + $0x14] sm:$0xf]
    %v123 = vld [vmem:[#allocation5 + $0x18] sm:$0xf]
    %v124 = vld [vmem:[#allocation5 + $0x1c] sm:$0xf]
    %v125 = vld [vmem:[#allocation5 + $0x20] sm:$0xf]
    %v126 = vld [vmem:[#allocation5 + $0x24] sm:$0xf]
    %v127 = vld [vmem:[#allocation5 + $0x28] sm:$0xf]
    %v128 = vld [vmem:[#allocation5 + $0x2c] sm:$0xf]
    %v129 = vld [vmem:[#allocation5 + $0x30] sm:$0xf]
    %v130 = vld [vmem:[#allocation5 + $0x34] sm:$0xf]
    %v131 = vld [vmem:[#allocation5 + $0x38] sm:$0xf]
    %v132 = vld [vmem:[#allocation5 + $0x3c] sm:$0xf]
    %v133 = vld [vmem:[#allocation8] sm:$0x1]
    %v135 = vlaneseq
    %v136 = vshrl.u32 %v135, 7
    %v137 = vsub.s32 0, %v136
    %v138 = vrot.slane %v133, %v137
    %v156 = vunpack.c.l.b16 %v117
    %v157 = vunpack.c.l.b16 %v118
    %v158 = vunpack.c.l.b16 %v119
    %v159 = vunpack.c.l.b16 %v120
    %v160 = vunpack.c.l.b16 %v121
    %v161 = vunpack.c.l.b16 %v122
    %v162 = vunpack.c.l.b16 %v123
    %v163 = vunpack.c.l.b16 %v124
    %v164 = vunpack.c.l.b16 %v125
    %v165 = vunpack.c.l.b16 %v126
    %v166 = vunpack.c.l.b16 %v127
    %v167 = vunpack.c.l.b16 %v128
    %v168 = vunpack.c.l.b16 %v129
    %v169 = vunpack.c.l.b16 %v130
    %v170 = vunpack.c.l.b16 %v131
    %v171 = vunpack.c.l.b16 %v132
    %v172 = vpack.c.b16 %v157, %v156
    %v173 = vpack.c.b16 %v159, %v158
    %v174 = vpack.c.b16 %v161, %v160
    %v175 = vpack.c.b16 %v163, %v162
    %v176 = vpack.c.b16 %v165, %v164
    %v177 = vpack.c.b16 %v167, %v166
    %v178 = vpack.c.b16 %v169, %v168
    %v179 = vpack.c.b16 %v171, %v170
    %188 = vmatprep.subr.bf16.mxu0 0
    %189 = vmatpush1.bf16.msra.mxu0 %v172
    %190 = vmatprep.subr.bf16.mxu0 0
    %191 = vmatpush1.bf16.msra.mxu0 %v173
    %192 = vmatprep.subr.bf16.mxu0 0
    %193 = vmatpush1.bf16.msra.mxu0 %v174
    %194 = vmatprep.subr.bf16.mxu0 0
    %195 = vmatpush1.bf16.msra.mxu0 %v175
    %196 = vmatprep.subr.bf16.mxu0 0
    %197 = vmatpush1.bf16.msra.mxu0 %v176
    %198 = vmatprep.subr.bf16.mxu0 0
    %199 = vmatpush1.bf16.msra.mxu0 %v177
    %200 = vmatprep.subr.bf16.mxu0 0
    %201 = vmatpush1.bf16.msra.mxu0 %v178
    %202 = vmatprep.subr.bf16.mxu0 0
    %203 = vmatpush1.bf16.msra.mxu0 %v179
    %204 = vmatprep.subr.bf16.mxu0 0
    %205 = vmatpush1.bf16.msra.mxu0 0
    %206 = vmatprep.subr.bf16.mxu0 0
    %207 = vmatpush1.bf16.msra.mxu0 0
    %208 = vmatprep.subr.bf16.mxu0 0
    %209 = vmatpush1.bf16.msra.mxu0 0
    %210 = vmatprep.subr.bf16.mxu0 0
    %211 = vmatpush1.bf16.msra.mxu0 0
    %212 = vmatprep.subr.bf16.mxu0 0
    %213 = vmatpush1.bf16.msra.mxu0 0
    %214 = vmatprep.subr.bf16.mxu0 0
    %215 = vmatpush1.bf16.msra.mxu0 0
    %216 = vmatprep.subr.bf16.mxu0 0
    %217 = vmatpush1.bf16.msra.mxu0 0
    %218 = vmatprep.subr.bf16.mxu0 0
    %219 = vmatpush1.bf16.msra.mxu0 0
    %220 = vmatprep.mubr.bf16.mxu0 0
    %221 = vmatmul.mubr.bf16.gmra.mrb[0].mxu0 %v116
    %v222 = vpop.f32.mrb[0].mxu0
    %v223 = vadd.f32 %v138, %v222
    %v224 = vpop.f32.mrb[0].mxu0
    %v225 = vpop.f32.mrb[0].mxu0
    %v226 = vpop.f32.mrb[0].mxu0
    %227 = vdwg.mxu0
    %v228 = vtanh.pop %v223
    %v229 = vld [vmem:[#allocation7] sm:$0xf]
    %v230 = vld [vmem:[#allocation7 + $0x4] sm:$0xf]
    %v231 = vld [vmem:[#allocation7 + $0x8] sm:$0xf]
    %v232 = vld [vmem:[#allocation7 + $0xc] sm:$0xf]
    %v233 = vld [vmem:[#allocation7 + $0x10] sm:$0xf]
    %v234 = vld [vmem:[#allocation7 + $0x14] sm:$0xf]
    %v235 = vld [vmem:[#allocation7 + $0x18] sm:$0xf]
    %v236 = vld [vmem:[#allocation7 + $0x1c] sm:$0xf]
    %v237 = vld [vmem:[#allocation7 + $0x20] sm:$0xf]
    %v238 = vld [vmem:[#allocation7 + $0x24] sm:$0xf]
    %v239 = vld [vmem:[#allocation7 + $0x28] sm:$0xf]
    %v240 = vld [vmem:[#allocation7 + $0x2c] sm:$0xf]
    %v241 = vld [vmem:[#allocation7 + $0x30] sm:$0xf]
    %v242 = vld [vmem:[#allocation7 + $0x34] sm:$0xf]
    %v243 = vld [vmem:[#allocation7 + $0x38] sm:$0xf]
    %v244 = vld [vmem:[#allocation7 + $0x3c] sm:$0xf]
    %v245 = vld [vmem:[#allocation10] sm:$0x1]
    %v247 = vlaneseq
    %v248 = vshrl.u32 %v247, 7
    %v249 = vsub.s32 0, %v248
    %v250 = vrot.slane %v245, %v249
    %v268 = vunpack.c.l.b16 %v229
    %v269 = vunpack.c.l.b16 %v230
    %v270 = vunpack.c.l.b16 %v231
    %v271 = vunpack.c.l.b16 %v232
    %v272 = vunpack.c.l.b16 %v233
    %v273 = vunpack.c.l.b16 %v234
    %v274 = vunpack.c.l.b16 %v235
    %v275 = vunpack.c.l.b16 %v236
    %v276 = vunpack.c.l.b16 %v237
    %v277 = vunpack.c.l.b16 %v238
    %v278 = vunpack.c.l.b16 %v239
    %v279 = vunpack.c.l.b16 %v240
    %v280 = vunpack.c.l.b16 %v241
    %v281 = vunpack.c.l.b16 %v242
    %v282 = vunpack.c.l.b16 %v243
    %v283 = vunpack.c.l.b16 %v244
    %v284 = vpack.c.b16 %v269, %v268
    %v285 = vpack.c.b16 %v271, %v270
    %v286 = vpack.c.b16 %v273, %v272
    %v287 = vpack.c.b16 %v275, %v274
    %v288 = vpack.c.b16 %v277, %v276
    %v289 = vpack.c.b16 %v279, %v278
    %v290 = vpack.c.b16 %v281, %v280
    %v291 = vpack.c.b16 %v283, %v282
    %300 = vmatprep.subr.bf16.mxu0 0
    %301 = vmatpush1.bf16.msra.mxu0 %v284
    %302 = vmatprep.subr.bf16.mxu0 0
    %303 = vmatpush1.bf16.msra.mxu0 %v285
    %304 = vmatprep.subr.bf16.mxu0 0
    %305 = vmatpush1.bf16.msra.mxu0 %v286
    %306 = vmatprep.subr.bf16.mxu0 0
    %307 = vmatpush1.bf16.msra.mxu0 %v287
    %308 = vmatprep.subr.bf16.mxu0 0
    %309 = vmatpush1.bf16.msra.mxu0 %v288
    %310 = vmatprep.subr.bf16.mxu0 0
    %311 = vmatpush1.bf16.msra.mxu0 %v289
    %312 = vmatprep.subr.bf16.mxu0 0
    %313 = vmatpush1.bf16.msra.mxu0 %v290
    %314 = vmatprep.subr.bf16.mxu0 0
    %315 = vmatpush1.bf16.msra.mxu0 %v291
    %316 = vmatprep.subr.bf16.mxu0 0
    %317 = vmatpush1.bf16.msra.mxu0 0
    %318 = vmatprep.subr.bf16.mxu0 0
    %319 = vmatpush1.bf16.msra.mxu0 0
    %320 = vmatprep.subr.bf16.mxu0 0
    %321 = vmatpush1.bf16.msra.mxu0 0
    %322 = vmatprep.subr.bf16.mxu0 0
    %323 = vmatpush1.bf16.msra.mxu0 0
    %324 = vmatprep.subr.bf16.mxu0 0
    %325 = vmatpush1.bf16.msra.mxu0 0
    %326 = vmatprep.subr.bf16.mxu0 0
    %327 = vmatpush1.bf16.msra.mxu0 0
    %328 = vmatprep.subr.bf16.mxu0 0
    %329 = vmatpush1.bf16.msra.mxu0 0
    %330 = vmatprep.subr.bf16.mxu0 0
    %331 = vmatpush1.bf16.msra.mxu0 0
    %332 = vmatprep.mubr.bf16.mxu0 0
    %333 = vmatmul.mubr.bf16.gmra.mrb[0].mxu0 %v116
    %v334 = vpop.f32.mrb[0].mxu0
    %v335 = vadd.f32 %v250, %v334
    %v336 = vpop.f32.mrb[0].mxu0
    %v337 = vpop.f32.mrb[0].mxu0
    %v338 = vpop.f32.mrb[0].mxu0
    %339 = vdwg.mxu0
    %v340 = vxor.u32 %v335, 2147483648
    %v341 = vmul.f32 %v340, 1.442695
    %v342 = vpow.pop %v341
    %v343 = vadd.f32 %v342, 1.0
    %v344 = vrcp.pop %v343
    %v345 = vmul.f32 1.0, %v344
    %v346 = vmul.f32 %v228, %v345
    %v347 = vpack.c.bf16 %v346, %v346
    %v348 = vld [vmem:[#allocation11] sm:$0xf]
    %v349 = vld [vmem:[#allocation11 + $0x4] sm:$0xf]
    %v350 = vld [vmem:[#allocation11 + $0x8] sm:$0xf]
    %v351 = vld [vmem:[#allocation11 + $0xc] sm:$0xf]
    %v352 = vld [vmem:[#allocation11 + $0x10] sm:$0xf]
    %v353 = vld [vmem:[#allocation11 + $0x14] sm:$0xf]
    %v354 = vld [vmem:[#allocation11 + $0x18] sm:$0xf]
    %v355 = vld [vmem:[#allocation11 + $0x1c] sm:$0xf]
    %v356 = vld [vmem:[#allocation11 + $0x20] sm:$0xf]
    %v357 = vld [vmem:[#allocation11 + $0x24] sm:$0xf]
    %v358 = vld [vmem:[#allocation11 + $0x28] sm:$0xf]
    %v359 = vld [vmem:[#allocation11 + $0x2c] sm:$0xf]
    %v360 = vld [vmem:[#allocation11 + $0x30] sm:$0xf]
    %v361 = vld [vmem:[#allocation11 + $0x34] sm:$0xf]
    %v362 = vld [vmem:[#allocation11 + $0x38] sm:$0xf]
    %v363 = vld [vmem:[#allocation11 + $0x3c] sm:$0xf]
    %v364 = vld [vmem:[#allocation13] sm:$0x1]
    %v366 = vlaneseq
    %v367 = vshrl.u32 %v366, 7
    %v368 = vsub.s32 0, %v367
    %v369 = vrot.slane %v364, %v368
    %v387 = vunpack.c.l.b16 %v348
    %v388 = vunpack.c.l.b16 %v349
    %v389 = vunpack.c.l.b16 %v350
    %v390 = vunpack.c.l.b16 %v351
    %v391 = vunpack.c.l.b16 %v352
    %v392 = vunpack.c.l.b16 %v353
    %v393 = vunpack.c.l.b16 %v354
    %v394 = vunpack.c.l.b16 %v355
    %v395 = vunpack.c.l.b16 %v356
    %v396 = vunpack.c.l.b16 %v357
    %v397 = vunpack.c.l.b16 %v358
    %v398 = vunpack.c.l.b16 %v359
    %v399 = vunpack.c.l.b16 %v360
    %v400 = vunpack.c.l.b16 %v361
    %v401 = vunpack.c.l.b16 %v362
    %v402 = vunpack.c.l.b16 %v363
    %v403 = vpack.c.b16 %v388, %v387
    %v404 = vpack.c.b16 %v390, %v389
    %v405 = vpack.c.b16 %v392, %v391
    %v406 = vpack.c.b16 %v394, %v393
    %v407 = vpack.c.b16 %v396, %v395
    %v408 = vpack.c.b16 %v398, %v397
    %v409 = vpack.c.b16 %v400, %v399
    %v410 = vpack.c.b16 %v402, %v401
    %419 = vmatprep.subr.bf16.mxu0 0
    %420 = vmatpush1.bf16.msra.mxu0 %v403
    %421 = vmatprep.subr.bf16.mxu0 0
    %422 = vmatpush1.bf16.msra.mxu0 %v404
    %423 = vmatprep.subr.bf16.mxu0 0
    %424 = vmatpush1.bf16.msra.mxu0 %v405
    %425 = vmatprep.subr.bf16.mxu0 0
    %426 = vmatpush1.bf16.msra.mxu0 %v406
    %427 = vmatprep.subr.bf16.mxu0 0
    %428 = vmatpush1.bf16.msra.mxu0 %v407
    %429 = vmatprep.subr.bf16.mxu0 0
    %430 = vmatpush1.bf16.msra.mxu0 %v408
    %431 = vmatprep.subr.bf16.mxu0 0
    %432 = vmatpush1.bf16.msra.mxu0 %v409
    %433 = vmatprep.subr.bf16.mxu0 0
    %434 = vmatpush1.bf16.msra.mxu0 %v410
    %435 = vmatprep.subr.bf16.mxu0 0
    %436 = vmatpush1.bf16.msra.mxu0 0
    %437 = vmatprep.subr.bf16.mxu0 0
    %438 = vmatpush1.bf16.msra.mxu0 0
    %439 = vmatprep.subr.bf16.mxu0 0
    %440 = vmatpush1.bf16.msra.mxu0 0
    %441 = vmatprep.subr.bf16.mxu0 0
    %442 = vmatpush1.bf16.msra.mxu0 0
    %443 = vmatprep.subr.bf16.mxu0 0
    %444 = vmatpush1.bf16.msra.mxu0 0
    %445 = vmatprep.subr.bf16.mxu0 0
    %446 = vmatpush1.bf16.msra.mxu0 0
    %447 = vmatprep.subr.bf16.mxu0 0
    %448 = vmatpush1.bf16.msra.mxu0 0
    %449 = vmatprep.subr.bf16.mxu0 0
    %450 = vmatpush1.bf16.msra.mxu0 0
    %451 = vmatprep.mubr.bf16.mxu0 0
    %452 = vmatmul.mubr.bf16.gmra.mrb[0].mxu0 %v347
    %v453 = vpop.f32.mrb[0].mxu0
    %v454 = vadd.f32 %v369, %v453
    %v455 = vpop.f32.mrb[0].mxu0
    %v456 = vpop.f32.mrb[0].mxu0
    %v457 = vpop.f32.mrb[0].mxu0
    %458 = vdwg.mxu0
    %459 = vst [vmem:[#allocation14] sm:$0xff] %v454
    // Predicated region
    $region58: #{_adv_classifier_padded.1} parent=1 // pred_check
      _
    $region59: #{_adv_classifier_padded.1} parent=1 // pred_check_branch
      %461 = sbr.rel (0) target = $region61
    $region60: #{_adv_classifier_padded.1} parent=1 // pred_region
      %s463 = ssub.s32 128, 128
      %464 = vsyncadd [#allocation4], %s463
      %s466 = sshll.u32 [#allocation14], 4
      %s467 = int_to_ptr.vmem [resolvable:$true] %s466
      %469 = dma.vmem_to_hbm [thread:$0]  %s467, 128, %s7, [#allocation4]
    $region61: #{_adv_classifier_padded.1} parent=1 // pred_fallthru
      _
    // Predicated region
    $region62: #{_adv_classifier_padded.1} parent=1 // pred_check
      _
    $region63: #{_adv_classifier_padded.1} parent=1 // pred_check_branch
      %471 = sbr.rel (0) target = $region65
    $region64: #{_adv_classifier_padded.1} parent=1 // pred_region
      %472 = dma.done [#allocation4], 128
    $region65: #{_adv_classifier_padded.1} parent=1 // pred_fallthru
      _
    %473 = vsyncpa [#allocation3], 1
    %474 = vsyncpa [#allocation6], 1
    %475 = vsyncpa [#allocation9], 1
    %476 = vsyncpa [#allocation12], 1
    %477 = vsyncpa [#allocation4], 1

// kernel: _adv_classifier_padded.1
$region0: #{_adv_classifier_padded.1}
  #allocation0 [shape = 'u32[]', space=smem, size = 0x4, offset = 0x4, fixed_abs, tag = 'smem constant byte address 0x4 - core index']
  #allocation1 [shape = 'u32[144,128]{1,0:T(1,128)}', space=vmem, size = 0x12000, scoped, tag = 'internal scratch']
  %s0 = inlined_call_operand.hbm [shape: f32[8,128], index: 0, kind: input, shape index: {}]
  %s1 = inlined_call_operand.hbm [shape: bf16[128,128], index: 1, kind: input, shape index: {}]
  %s2 = inlined_call_operand.hbm [shape: bf16[128,128], index: 2, kind: input, shape index: {}]
  %s3 = inlined_call_operand.hbm [shape: f32[1,128], index: 3, kind: input, shape index: {}]
  %s4 = inlined_call_operand.hbm [shape: f32[1,128], index: 4, kind: input, shape index: {}]
  %s5 = inlined_call_operand.hbm [shape: bf16[128,128], index: 5, kind: input, shape index: {}]
  %s6 = inlined_call_operand.hbm [shape: f32[1,128], index: 6, kind: input, shape index: {}]
  %s7 = inlined_call_operand.hbm [shape: f32[8,128], index: 7, kind: output, shape index: {}]
  %s8 = sld [smem:[#allocation0]]
  $region66: #{_adv_classifier_padded.1} parent=0
    _
  %s10 = ssub.s32 1, %s8
  %s11 = scalar_select 0, %s10, %s8
  $region1: #{_adv_classifier_padded.1} parent=0
    #allocation2 [shape = 'u8[4096]{0}', space=vmem, size = 0x1000, scoped, tag = 'input window, operand 0, single buffered']
    #allocation3 [shape = 's32[1]{0}', space=sflag, size = 0x4, scoped, tag = 'scoped memory for _adv_classifier_padded.1']
    #allocation4 [shape = 's32[1]{0}', space=sflag, size = 0x4, scoped, tag = 'scoped memory for _adv_classifier_padded.1']
    #allocation5 [shape = 'u8[32768]{0}', space=vmem, size = 0x8000, scoped, tag = 'input window, operand 1, single buffered']
    #allocation6 [shape = 's32[1]{0}', space=sflag, size = 0x4, scoped, tag = 'scoped memory for _adv_classifier_padded.1']
    #allocation7 [shape = 'u8[32768]{0}', space=vmem, size = 0x8000, scoped, tag = 'input window, operand 2, single buffered']
    #allocation8 [shape = 'u8[512]{0}', space=vmem, size = 0x400, scoped, tag = 'input window, operand 3, single buffered']
    #allocation9 [shape = 's32[1]{0}', space=sflag, size = 0x4, scoped, tag = 'scoped memory for _adv_classifier_padded.1']
    #allocation10 [shape = 'u8[512]{0}', space=vmem, size = 0x400, scoped, tag = 'input window, operand 4, single buffered']
    #allocation11 [shape = 'u8[32768]{0}', space=vmem, size = 0x8000, scoped, tag = 'input window, operand 5, single buffered']
    #allocation12 [shape = 's32[1]{0}', space=sflag, size = 0x4, scoped, tag = 'scoped memory for _adv_classifier_padded.1']
    #allocation13 [shape = 'u8[512]{0}', space=vmem, size = 0x400, scoped, tag = 'input window, operand 6, single buffered']
    #allocation14 [shape = 'u8[4096]{0}', space=vmem, size = 0x1000, scoped, tag = 'output window, operand 0, single buffered']
    %12 = vsyncpa [#allocation3], 0
    %13 = vsyncpa [#allocation6], 0
    %14 = vsyncpa [#allocation9], 0
    %15 = vsyncpa [#allocation12], 0
    %16 = vsyncpa [#allocation4], 0
    // Predicated region
    $region2: #{_adv_classifier_padded.1} parent=1 // pred_check
      _
    $region3: #{_adv_classifier_padded.1} parent=1 // pred_check_branch
      %18 = sbr.rel (0) target = $region5
    $region4: #{_adv_classifier_padded.1} parent=1 // pred_region
      %s20 = ssub.s32 128, 128
      %21 = vsyncadd [#allocation3], %s20
      %s23 = sshll.u32 [#allocation2], 4
      %s24 = int_to_ptr.vmem [resolvable:$true] %s23
      %26 = dma.hbm_to_vmem [thread:$0]  %s0, 128, %s24, [#allocation3]
    $region5: #{_adv_classifier_padded.1} parent=1 // pred_fallthru
      _
    // Predicated region
    $region6: #{_adv_classifier_padded.1} parent=1 // pred_check
      _
    $region7: #{_adv_classifier_padded.1} parent=1 // pred_check_branch
      %28 = sbr.rel (0) target = $region9
    $region8: #{_adv_classifier_padded.1} parent=1 // pred_region
      %s30 = ssub.s32 1024, 1024
      %31 = vsyncadd [#allocation6], %s30
      %s32 = sshll.u32 [#allocation5], 4
      %s33 = int_to_ptr.vmem [resolvable:$true] %s32
      %38 = dma.hbm_to_vmem [thread:$0]  %s1, 1024, %s33, [#allocation6], 64, 64, 4
    $region9: #{_adv_classifier_padded.1} parent=1 // pred_fallthru
      _
    // Predicated region
    $region10: #{_adv_classifier_padded.1} parent=1 // pred_check
      _
    $region11: #{_adv_classifier_padded.1} parent=1 // pred_check_branch
      %40 = sbr.rel (0) target = $region13
    $region12: #{_adv_classifier_padded.1} parent=1 // pred_region
      %s42 = ssub.s32 1024, 1024
      %43 = vsyncadd [#allocation6], %s42
      %s44 = sshll.u32 [#allocation7], 4
      %s45 = int_to_ptr.vmem [resolvable:$true] %s44
      %50 = dma.hbm_to_vmem [thread:$0]  %s2, 1024, %s45, [#allocation6], 64, 64, 4
    $region13: #{_adv_classifier_padded.1} parent=1 // pred_fallthru
      _
    // Predicated region
    $region14: #{_adv_classifier_padded.1} parent=1 // pred_check
      _
    $region15: #{_adv_classifier_padded.1} parent=1 // pred_check_branch
      %52 = sbr.rel (0) target = $region17
    $region16: #{_adv_classifier_padded.1} parent=1 // pred_region
      %s54 = ssub.s32 16, 16
      %55 = vsyncadd [#allocation9], %s54
      %s57 = sshll.u32 [#allocation8], 4
      %s58 = int_to_ptr.vmem [resolvable:$true] %s57
      %60 = dma.hbm_to_vmem [thread:$0]  %s3, 16, %s58, [#allocation9]
    $region17: #{_adv_classifier_padded.1} parent=1 // pred_fallthru
      _
    // Predicated region
    $region18: #{_adv_classifier_padded.1} parent=1 // pred_check
      _
    $region19: #{_adv_classifier_padded.1} parent=1 // pred_check_branch
      %62 = sbr.rel (0) target = $region21
    $region20: #{_adv_classifier_padded.1} parent=1 // pred_region
      %s64 = ssub.s32 16, 16
      %65 = vsyncadd [#allocation9], %s64
      %s67 = sshll.u32 [#allocation10], 4
      %s68 = int_to_ptr.vmem [resolvable:$true] %s67
      %70 = dma.hbm_to_vmem [thread:$0]  %s4, 16, %s68, [#allocation9]
    $region21: #{_adv_classifier_padded.1} parent=1 // pred_fallthru
      _
    // Predicated region
    $region22: #{_adv_classifier_padded.1} parent=1 // pred_check
      _
    $region23: #{_adv_classifier_padded.1} parent=1 // pred_check_branch
      %72 = sbr.rel (0) target = $region25
    $region24: #{_adv_classifier_padded.1} parent=1 // pred_region
      %s74 = ssub.s32 1024, 1024
      %75 = vsyncadd [#allocation12], %s74
      %s76 = sshll.u32 [#allocation11], 4
      %s77 = int_to_ptr.vmem [resolvable:$true] %s76
      %82 = dma.hbm_to_vmem [thread:$0]  %s5, 1024, %s77, [#allocation12], 64, 64, 4
    $region25: #{_adv_classifier_padded.1} parent=1 // pred_fallthru
      _
    // Predicated region
    $region26: #{_adv_classifier_padded.1} parent=1 // pred_check
      _
    $region27: #{_adv_classifier_padded.1} parent=1 // pred_check_branch
      %84 = sbr.rel (0) target = $region29
    $region28: #{_adv_classifier_padded.1} parent=1 // pred_region
      %s86 = ssub.s32 16, 16
      %87 = vsyncadd [#allocation12], %s86
      %s89 = sshll.u32 [#allocation13], 4
      %s90 = int_to_ptr.vmem [resolvable:$true] %s89
      %92 = dma.hbm_to_vmem [thread:$0]  %s6, 16, %s90, [#allocation12]
    $region29: #{_adv_classifier_padded.1} parent=1 // pred_fallthru
      _
    // Predicated region
    $region30: #{_adv_classifier_padded.1} parent=1 // pred_check
      _
    $region31: #{_adv_classifier_padded.1} parent=1 // pred_check_branch
      %94 = sbr.rel (0) target = $region33
    $region32: #{_adv_classifier_padded.1} parent=1 // pred_region
      %95 = dma.done [#allocation3], 128
    $region33: #{_adv_classifier_padded.1} parent=1 // pred_fallthru
      _
    // Predicated region
    $region34: #{_adv_classifier_padded.1} parent=1 // pred_check
      _
    $region35: #{_adv_classifier_padded.1} parent=1 // pred_check_branch
      %97 = sbr.rel (0) target = $region37
    $region36: #{_adv_classifier_padded.1} parent=1 // pred_region
      %98 = dma.done [#allocation6], 1024
    $region37: #{_adv_classifier_padded.1} parent=1 // pred_fallthru
      _
    // Predicated region
    $region38: #{_adv_classifier_padded.1} parent=1 // pred_check
      _
    $region39: #{_adv_classifier_padded.1} parent=1 // pred_check_branch
      %100 = sbr.rel (0) target = $region41
    $region40: #{_adv_classifier_padded.1} parent=1 // pred_region
      %101 = dma.done [#allocation6], 1024
    $region41: #{_adv_classifier_padded.1} parent=1 // pred_fallthru
      _
    // Predicated region
    $region42: #{_adv_classifier_padded.1} parent=1 // pred_check
      _
    $region43: #{_adv_classifier_padded.1} parent=1 // pred_check_branch
      %103 = sbr.rel (0) target = $region45
    $region44: #{_adv_classifier_padded.1} parent=1 // pred_region
      %104 = dma.done [#allocation9], 16
    $region45: #{_adv_classifier_padded.1} parent=1 // pred_fallthru
      _
    // Predicated region
    $region46: #{_adv_classifier_padded.1} parent=1 // pred_check
      _
    $region47: #{_adv_classifier_padded.1} parent=1 // pred_check_branch
      %106 = sbr.rel (0) target = $region49
    $region48: #{_adv_classifier_padded.1} parent=1 // pred_region
      %107 = dma.done [#allocation9], 16
    $region49: #{_adv_classifier_padded.1} parent=1 // pred_fallthru
      _
    // Predicated region
    $region50: #{_adv_classifier_padded.1} parent=1 // pred_check
      _
    $region51: #{_adv_classifier_padded.1} parent=1 // pred_check_branch
      %109 = sbr.rel (0) target = $region53
    $region52: #{_adv_classifier_padded.1} parent=1 // pred_region
      %110 = dma.done [#allocation12], 1024
    $region53: #{_adv_classifier_padded.1} parent=1 // pred_fallthru
      _
    // Predicated region
    $region54: #{_adv_classifier_padded.1} parent=1 // pred_check
      _
    $region55: #{_adv_classifier_padded.1} parent=1 // pred_check_branch
      %112 = sbr.rel (0) target = $region57
    $region56: #{_adv_classifier_padded.1} parent=1 // pred_region
      %113 = dma.done [#allocation12], 16
    $region57: #{_adv_classifier_padded.1} parent=1 // pred_fallthru
      _
    %v115 = vld [vmem:[#allocation2] sm:$0xff]
    %v116 = vpack.c.bf16 %v115, %v115
    %v117 = vld [vmem:[#allocation5] sm:$0xf]
    %v118 = vld [vmem:[#allocation5 + $0x4] sm:$0xf]
    %v119 = vld [vmem:[#allocation5 + $0x8] sm:$0xf]
    %v120 = vld [vmem:[#allocation5 + $0xc] sm:$0xf]
    %v121 = vld [vmem:[#allocation5 + $0x10] sm:$0xf]
    %v122 = vld [vmem:[#allocation5 + $0x14] sm:$0xf]
    %v123 = vld [vmem:[#allocation5 + $0x18] sm:$0xf]
    %v124 = vld [vmem:[#allocation5 + $0x1c] sm:$0xf]
    %v125 = vld [vmem:[#allocation5 + $0x20] sm:$0xf]
    %v126 = vld [vmem:[#allocation5 + $0x24] sm:$0xf]
    %v127 = vld [vmem:[#allocation5 + $0x28] sm:$0xf]
    %v128 = vld [vmem:[#allocation5 + $0x2c] sm:$0xf]
    %v129 = vld [vmem:[#allocation5 + $0x30] sm:$0xf]
    %v130 = vld [vmem:[#allocation5 + $0x34] sm:$0xf]
    %v131 = vld [vmem:[#allocation5 + $0x38] sm:$0xf]
    %v132 = vld [vmem:[#allocation5 + $0x3c] sm:$0xf]
    %v133 = vld [vmem:[#allocation8] sm:$0x1]
    %v135 = vlaneseq
    %v136 = vshrl.u32 %v135, 7
    %v137 = vsub.s32 0, %v136
    %v138 = vrot.slane %v133, %v137
    %v156 = vunpack.c.l.b16 %v117
    %v157 = vunpack.c.l.b16 %v118
    %v158 = vunpack.c.l.b16 %v119
    %v159 = vunpack.c.l.b16 %v120
    %v160 = vunpack.c.l.b16 %v121
    %v161 = vunpack.c.l.b16 %v122
    %v162 = vunpack.c.l.b16 %v123
    %v163 = vunpack.c.l.b16 %v124
    %v164 = vunpack.c.l.b16 %v125
    %v165 = vunpack.c.l.b16 %v126
    %v166 = vunpack.c.l.b16 %v127
    %v167 = vunpack.c.l.b16 %v128
    %v168 = vunpack.c.l.b16 %v129
    %v169 = vunpack.c.l.b16 %v130
    %v170 = vunpack.c.l.b16 %v131
    %v171 = vunpack.c.l.b16 %v132
    %v172 = vpack.c.b16 %v157, %v156
    %v173 = vpack.c.b16 %v159, %v158
    %v174 = vpack.c.b16 %v161, %v160
    %v175 = vpack.c.b16 %v163, %v162
    %v176 = vpack.c.b16 %v165, %v164
    %v177 = vpack.c.b16 %v167, %v166
    %v178 = vpack.c.b16 %v169, %v168
    %v179 = vpack.c.b16 %v171, %v170
    %188 = vmatprep.subr.bf16.mxu0 0
    %189 = vmatpush1.bf16.msra.mxu0 %v172
    %190 = vmatprep.subr.bf16.mxu0 0
    %191 = vmatpush1.bf16.msra.mxu0 %v173
    %192 = vmatprep.subr.bf16.mxu0 0
    %193 = vmatpush1.bf16.msra.mxu0 %v174
    %194 = vmatprep.subr.bf16.mxu0 0
    %195 = vmatpush1.bf16.msra.mxu0 %v175
    %196 = vmatprep.subr.bf16.mxu0 0
    %197 = vmatpush1.bf16.msra.mxu0 %v176
    %198 = vmatprep.subr.bf16.mxu0 0
    %199 = vmatpush1.bf16.msra.mxu0 %v177
    %200 = vmatprep.subr.bf16.mxu0 0
    %201 = vmatpush1.bf16.msra.mxu0 %v178
    %202 = vmatprep.subr.bf16.mxu0 0
    %203 = vmatpush1.bf16.msra.mxu0 %v179
    %204 = vmatprep.subr.bf16.mxu0 0
    %205 = vmatpush1.bf16.msra.mxu0 0
    %206 = vmatprep.subr.bf16.mxu0 0
    %207 = vmatpush1.bf16.msra.mxu0 0
    %208 = vmatprep.subr.bf16.mxu0 0
    %209 = vmatpush1.bf16.msra.mxu0 0
    %210 = vmatprep.subr.bf16.mxu0 0
    %211 = vmatpush1.bf16.msra.mxu0 0
    %212 = vmatprep.subr.bf16.mxu0 0
    %213 = vmatpush1.bf16.msra.mxu0 0
    %214 = vmatprep.subr.bf16.mxu0 0
    %215 = vmatpush1.bf16.msra.mxu0 0
    %216 = vmatprep.subr.bf16.mxu0 0
    %217 = vmatpush1.bf16.msra.mxu0 0
    %218 = vmatprep.subr.bf16.mxu0 0
    %219 = vmatpush1.bf16.msra.mxu0 0
    %220 = vmatprep.mubr.bf16.mxu0 0
    %221 = vmatmul.mubr.bf16.gmra.mrb[0].mxu0 %v116
    %v222 = vpop.f32.mrb[0].mxu0
    %v223 = vadd.f32 %v138, %v222
    %v224 = vpop.f32.mrb[0].mxu0
    %v225 = vpop.f32.mrb[0].mxu0
    %v226 = vpop.f32.mrb[0].mxu0
    %227 = vdwg.mxu0
    %v228 = vtanh.pop %v223
    %v229 = vld [vmem:[#allocation7] sm:$0xf]
    %v230 = vld [vmem:[#allocation7 + $0x4] sm:$0xf]
    %v231 = vld [vmem:[#allocation7 + $0x8] sm:$0xf]
    %v232 = vld [vmem:[#allocation7 + $0xc] sm:$0xf]
    %v233 = vld [vmem:[#allocation7 + $0x10] sm:$0xf]
    %v234 = vld [vmem:[#allocation7 + $0x14] sm:$0xf]
    %v235 = vld [vmem:[#allocation7 + $0x18] sm:$0xf]
    %v236 = vld [vmem:[#allocation7 + $0x1c] sm:$0xf]
    %v237 = vld [vmem:[#allocation7 + $0x20] sm:$0xf]
    %v238 = vld [vmem:[#allocation7 + $0x24] sm:$0xf]
    %v239 = vld [vmem:[#allocation7 + $0x28] sm:$0xf]
    %v240 = vld [vmem:[#allocation7 + $0x2c] sm:$0xf]
    %v241 = vld [vmem:[#allocation7 + $0x30] sm:$0xf]
    %v242 = vld [vmem:[#allocation7 + $0x34] sm:$0xf]
    %v243 = vld [vmem:[#allocation7 + $0x38] sm:$0xf]
    %v244 = vld [vmem:[#allocation7 + $0x3c] sm:$0xf]
    %v245 = vld [vmem:[#allocation10] sm:$0x1]
    %v247 = vlaneseq
    %v248 = vshrl.u32 %v247, 7
    %v249 = vsub.s32 0, %v248
    %v250 = vrot.slane %v245, %v249
    %v268 = vunpack.c.l.b16 %v229
    %v269 = vunpack.c.l.b16 %v230
    %v270 = vunpack.c.l.b16 %v231
    %v271 = vunpack.c.l.b16 %v232
    %v272 = vunpack.c.l.b16 %v233
    %v273 = vunpack.c.l.b16 %v234
    %v274 = vunpack.c.l.b16 %v235
    %v275 = vunpack.c.l.b16 %v236
    %v276 = vunpack.c.l.b16 %v237
    %v277 = vunpack.c.l.b16 %v238
    %v278 = vunpack.c.l.b16 %v239
    %v279 = vunpack.c.l.b16 %v240
    %v280 = vunpack.c.l.b16 %v241
    %v281 = vunpack.c.l.b16 %v242
    %v282 = vunpack.c.l.b16 %v243
    %v283 = vunpack.c.l.b16 %v244
    %v284 = vpack.c.b16 %v269, %v268
    %v285 = vpack.c.b16 %v271, %v270
    %v286 = vpack.c.b16 %v273, %v272
    %v287 = vpack.c.b16 %v275, %v274
    %v288 = vpack.c.b16 %v277, %v276
    %v289 = vpack.c.b16 %v279, %v278
    %v290 = vpack.c.b16 %v281, %v280
    %v291 = vpack.c.b16 %v283, %v282
    %300 = vmatprep.subr.bf16.mxu0 0
    %301 = vmatpush1.bf16.msra.mxu0 %v284
    %302 = vmatprep.subr.bf16.mxu0 0
    %303 = vmatpush1.bf16.msra.mxu0 %v285
    %304 = vmatprep.subr.bf16.mxu0 0
    %305 = vmatpush1.bf16.msra.mxu0 %v286
    %306 = vmatprep.subr.bf16.mxu0 0
    %307 = vmatpush1.bf16.msra.mxu0 %v287
    %308 = vmatprep.subr.bf16.mxu0 0
    %309 = vmatpush1.bf16.msra.mxu0 %v288
    %310 = vmatprep.subr.bf16.mxu0 0
    %311 = vmatpush1.bf16.msra.mxu0 %v289
    %312 = vmatprep.subr.bf16.mxu0 0
    %313 = vmatpush1.bf16.msra.mxu0 %v290
    %314 = vmatprep.subr.bf16.mxu0 0
    %315 = vmatpush1.bf16.msra.mxu0 %v291
    %316 = vmatprep.subr.bf16.mxu0 0
    %317 = vmatpush1.bf16.msra.mxu0 0
    %318 = vmatprep.subr.bf16.mxu0 0
    %319 = vmatpush1.bf16.msra.mxu0 0
    %320 = vmatprep.subr.bf16.mxu0 0
    %321 = vmatpush1.bf16.msra.mxu0 0
    %322 = vmatprep.subr.bf16.mxu0 0
    %323 = vmatpush1.bf16.msra.mxu0 0
    %324 = vmatprep.subr.bf16.mxu0 0
    %325 = vmatpush1.bf16.msra.mxu0 0
    %326 = vmatprep.subr.bf16.mxu0 0
    %327 = vmatpush1.bf16.msra.mxu0 0
    %328 = vmatprep.subr.bf16.mxu0 0
    %329 = vmatpush1.bf16.msra.mxu0 0
    %330 = vmatprep.subr.bf16.mxu0 0
    %331 = vmatpush1.bf16.msra.mxu0 0
    %332 = vmatprep.mubr.bf16.mxu0 0
    %333 = vmatmul.mubr.bf16.gmra.mrb[0].mxu0 %v116
    %v334 = vpop.f32.mrb[0].mxu0
    %v335 = vadd.f32 %v250, %v334
    %v336 = vpop.f32.mrb[0].mxu0
    %v337 = vpop.f32.mrb[0].mxu0
    %v338 = vpop.f32.mrb[0].mxu0
    %339 = vdwg.mxu0
    %v340 = vxor.u32 %v335, 2147483648
    %v341 = vmul.f32 %v340, 1.442695
    %v342 = vpow.pop %v341
    %v343 = vadd.f32 %v342, 1.0
    %v344 = vrcp.pop %v343
    %v345 = vmul.f32 1.0, %v344
    %v346 = vmul.f32 %v228, %v345
    %v347 = vpack.c.bf16 %v346, %v346
    %v348 = vld [vmem:[#allocation11] sm:$0xf]
    %v349 = vld [vmem:[#allocation11 + $0x4] sm:$0xf]
    %v350 = vld [vmem:[#allocation11 + $0x8] sm:$0xf]
    %v351 = vld [vmem:[#allocation11 + $0xc] sm:$0xf]
    %v352 = vld [vmem:[#allocation11 + $0x10] sm:$0xf]
    %v353 = vld [vmem:[#allocation11 + $0x14] sm:$0xf]
    %v354 = vld [vmem:[#allocation11 + $0x18] sm:$0xf]
    %v355 = vld [vmem:[#allocation11 + $0x1c] sm:$0xf]
    %v356 = vld [vmem:[#allocation11 + $0x20] sm:$0xf]
    %v357 = vld [vmem:[#allocation11 + $0x24] sm:$0xf]
    %v358 = vld [vmem:[#allocation11 + $0x28] sm:$0xf]
    %v359 = vld [vmem:[#allocation11 + $0x2c] sm:$0xf]
    %v360 = vld [vmem:[#allocation11 + $0x30] sm:$0xf]
    %v361 = vld [vmem:[#allocation11 + $0x34] sm:$0xf]
    %v362 = vld [vmem:[#allocation11 + $0x38] sm:$0xf]
    %v363 = vld [vmem:[#allocation11 + $0x3c] sm:$0xf]
    %v364 = vld [vmem:[#allocation13] sm:$0x1]
    %v366 = vlaneseq
    %v367 = vshrl.u32 %v366, 7
    %v368 = vsub.s32 0, %v367
    %v369 = vrot.slane %v364, %v368
    %v387 = vunpack.c.l.b16 %v348
    %v388 = vunpack.c.l.b16 %v349
    %v389 = vunpack.c.l.b16 %v350
    %v390 = vunpack.c.l.b16 %v351
    %v391 = vunpack.c.l.b16 %v352
    %v392 = vunpack.c.l.b16 %v353
    %v393 = vunpack.c.l.b16 %v354
    %v394 = vunpack.c.l.b16 %v355
    %v395 = vunpack.c.l.b16 %v356
    %v396 = vunpack.c.l.b16 %v357
    %v397 = vunpack.c.l.b16 %v358
    %v398 = vunpack.c.l.b16 %v359
    %v399 = vunpack.c.l.b16 %v360
    %v400 = vunpack.c.l.b16 %v361
    %v401 = vunpack.c.l.b16 %v362
    %v402 = vunpack.c.l.b16 %v363
    %v403 = vpack.c.b16 %v388, %v387
    %v404 = vpack.c.b16 %v390, %v389
    %v405 = vpack.c.b16 %v392, %v391
    %v406 = vpack.c.b16 %v394, %v393
    %v407 = vpack.c.b16 %v396, %v395
    %v408 = vpack.c.b16 %v398, %v397
    %v409 = vpack.c.b16 %v400, %v399
    %v410 = vpack.c.b16 %v402, %v401
    %419 = vmatprep.subr.bf16.mxu0 0
    %420 = vmatpush1.bf16.msra.mxu0 %v403
    %421 = vmatprep.subr.bf16.mxu0 0
    %422 = vmatpush1.bf16.msra.mxu0 %v404
    %423 = vmatprep.subr.bf16.mxu0 0
    %424 = vmatpush1.bf16.msra.mxu0 %v405
    %425 = vmatprep.subr.bf16.mxu0 0
    %426 = vmatpush1.bf16.msra.mxu0 %v406
    %427 = vmatprep.subr.bf16.mxu0 0
    %428 = vmatpush1.bf16.msra.mxu0 %v407
    %429 = vmatprep.subr.bf16.mxu0 0
    %430 = vmatpush1.bf16.msra.mxu0 %v408
    %431 = vmatprep.subr.bf16.mxu0 0
    %432 = vmatpush1.bf16.msra.mxu0 %v409
    %433 = vmatprep.subr.bf16.mxu0 0
    %434 = vmatpush1.bf16.msra.mxu0 %v410
    %435 = vmatprep.subr.bf16.mxu0 0
    %436 = vmatpush1.bf16.msra.mxu0 0
    %437 = vmatprep.subr.bf16.mxu0 0
    %438 = vmatpush1.bf16.msra.mxu0 0
    %439 = vmatprep.subr.bf16.mxu0 0
    %440 = vmatpush1.bf16.msra.mxu0 0
    %441 = vmatprep.subr.bf16.mxu0 0
    %442 = vmatpush1.bf16.msra.mxu0 0
    %443 = vmatprep.subr.bf16.mxu0 0
    %444 = vmatpush1.bf16.msra.mxu0 0
    %445 = vmatprep.subr.bf16.mxu0 0
    %446 = vmatpush1.bf16.msra.mxu0 0
    %447 = vmatprep.subr.bf16.mxu0 0
    %448 = vmatpush1.bf16.msra.mxu0 0
    %449 = vmatprep.subr.bf16.mxu0 0
    %450 = vmatpush1.bf16.msra.mxu0 0
    %451 = vmatprep.mubr.bf16.mxu0 0
    %452 = vmatmul.mubr.bf16.gmra.mrb[0].mxu0 %v347
    %v453 = vpop.f32.mrb[0].mxu0
    %v454 = vadd.f32 %v369, %v453
    %v455 = vpop.f32.mrb[0].mxu0
    %v456 = vpop.f32.mrb[0].mxu0
    %v457 = vpop.f32.mrb[0].mxu0
    %458 = vdwg.mxu0
    %459 = vst [vmem:[#allocation14] sm:$0xff] %v454
    // Predicated region
    $region58: #{_adv_classifier_padded.1} parent=1 // pred_check
      _
    $region59: #{_adv_classifier_padded.1} parent=1 // pred_check_branch
      %461 = sbr.rel (0) target = $region61
    $region60: #{_adv_classifier_padded.1} parent=1 // pred_region
      %s463 = ssub.s32 128, 128
      %464 = vsyncadd [#allocation4], %s463
      %s466 = sshll.u32 [#allocation14], 4
      %s467 = int_to_ptr.vmem [resolvable:$true] %s466
      %469 = dma.vmem_to_hbm [thread:$0]  %s467, 128, %s7, [#allocation4]
    $region61: #{_adv_classifier_padded.1} parent=1 // pred_fallthru
      _
    // Predicated region
    $region62: #{_adv_classifier_padded.1} parent=1 // pred_check
      _
    $region63: #{_adv_classifier_padded.1} parent=1 // pred_check_branch
      %471 = sbr.rel (0) target = $region65
    $region64: #{_adv_classifier_padded.1} parent=1 // pred_region
      %472 = dma.done [#allocation4], 128
    $region65: #{_adv_classifier_padded.1} parent=1 // pred_fallthru
      _
    %473 = vsyncpa [#allocation3], 1
    %474 = vsyncpa [#allocation6], 1
    %475 = vsyncpa [#allocation9], 1
    %476 = vsyncpa [#allocation12], 1
    %477 = vsyncpa [#allocation4], 1

</llo_original>
